<compile_context>
chip_gen: v6e
topology: v6e:2x2x1
jax: 0.10.0
libtpu: 0.0.40
codegen_flags: <defaults>
</compile_context>

<pallas_src>
import jax
import jax.numpy as jnp
from jax.experimental import pallas as pl
from jax.experimental.pallas import tpu as pltpu


# ---------------------------------------------------------------------------
# Single fused kernel, one batch tile per grid step.
# ---------------------------------------------------------------------------
def diff_kernel(img1_ref, img2_ref, econ_ref,            # batch-tiled data
                wimg_ref, wecon_ref,                     # surrogate level model (bias folded)
                w1f1_ref, w1f2_ref, w1e_ref, b1_ref,     # Linear(13,256) split by input row
                w2_ref, b2_ref,                          # Linear(256,128)
                w3_ref, b3_ref,                          # Linear(128,64)
                w4_ref, b4_ref,                          # Linear(64,1) as (1,64) row + (1,1) bias
                out_ref):
    econ = econ_ref[...]                                  # (TB, 11)
    wimg = wimg_ref[...]                                  # (1, C*HW) pre-scaled by 1/HW

    # Surrogate level model (GAP over HxW + linear), bias folded into b1_eff.
    econ_c = jnp.sum(econ * wecon_ref[...], axis=1, keepdims=True)             # (TB, 1)
    feat1 = jnp.sum(img1_ref[...] * wimg, axis=1, keepdims=True) + econ_c      # (TB, 1)
    feat2 = jnp.sum(img2_ref[...] * wimg, axis=1, keepdims=True) + econ_c      # (TB, 1)

    # x = cat([feat1, feat2, econ], 1) never materialized:
    #   x @ W1 = feat1 * W1[0,:] + feat2 * W1[1,:] + econ @ W1[2:13,:]
    h = feat1 * w1f1_ref[...] + feat2 * w1f2_ref[...]
    h = h + jnp.dot(econ, w1e_ref[...], preferred_element_type=jnp.float32)
    h = jnp.maximum(h + b1_ref[...], 0.0)                                       # (TB, 256)
    # Dropout(0.2): identity at inference.
    h = jnp.maximum(jnp.dot(h, w2_ref[...], preferred_element_type=jnp.float32)
                    + b2_ref[...], 0.0)                                          # (TB, 128)
    h = jnp.maximum(jnp.dot(h, w3_ref[...], preferred_element_type=jnp.float32)
                    + b3_ref[...], 0.0)                                          # (TB, 64)
    # Final Linear(64,1): VPU mul + lane reduce (avoids (64,1) padded matmul).
    out_ref[...] = jnp.sum(h * w4_ref[...], axis=1, keepdims=True) + b4_ref[...]  # (TB, 1)


def diff_from_level_model_forward(img1, img2, econ_features, params, tb_max=512):
    B, C, H, W = img1.shape
    HW = H * W
    CHW = C * HW
    E = econ_features.shape[1]

    img1_2d = img1.reshape(B, CHW)        # free reshape, lane-dense layout (NCHW flatten)
    img2_2d = img2.reshape(B, CHW)

    # Batch tile: full batch when small, else 512 rows (multiple of 8; ~8 MiB of
    # double-buffered image tiles -> fits v5e/v6e/v7x scoped VMEM comfortably).
    tb = B if B <= tb_max else tb_max
    grid = (pl.cdiv(B, tb),)

    def batch_spec(n_cols):
        return pl.BlockSpec((tb, n_cols), lambda i: (i, 0))

    def const_spec(shape):                 # weights: DMA'd once, resident across steps
        return pl.BlockSpec(shape, lambda i: (0, 0))

    wimg_rep = params["lvl_w_img_rep"]                      # (1, C*HW), precomputed
    w1f1, w1f2, w1e = params["mlp_w1_f1"], params["mlp_w1_f2"], params["mlp_w1_e"]
    b1_eff = params["mlp_b1_eff"]

    weight_elems = (wimg_rep.size + params["lvl_w_econ"].size
                    + 13 * 256 + 256 + 256 * 128 + 128 + 128 * 64 + 64 + 64 + 1)
    cost = pl.CostEstimate(
        flops=B * (4 * CHW + 2 * (13 * 256 + 256 * 128 + 128 * 64 + 64)),
        transcendentals=0,
        bytes_accessed=4 * (2 * B * CHW + B * E + B + weight_elems),
    )

    return pl.pallas_call(
        diff_kernel,
        out_shape=jax.ShapeDtypeStruct((B, 1), jnp.float32),
        grid=grid,
        in_specs=[batch_spec(CHW), batch_spec(CHW), batch_spec(E),       # img1, img2, econ
                  const_spec(wimg_rep.shape),                            # wimg_rep
                  const_spec(params["lvl_w_econ"].shape),                # wecon
                  const_spec(w1f1.shape), const_spec(w1f2.shape),        # w1 rows
                  const_spec(w1e.shape), const_spec(b1_eff.shape),       # w1_econ, b1(+lvl_b fold)
                  const_spec(params["mlp_w2"].shape), const_spec(params["mlp_b2"].shape),
                  const_spec(params["mlp_w3"].shape), const_spec(params["mlp_b3"].shape),
                  const_spec(params["mlp_w4"].shape), const_spec(params["mlp_b4"].shape)],
        out_specs=batch_spec(1),
        compiler_params=pltpu.CompilerParams(
            dimension_semantics=("parallel",),
            vmem_limit_bytes=32 * 1024 * 1024),
        cost_estimate=cost,
    )(img1_2d, img2_2d, econ_features,
      wimg_rep, params["lvl_w_econ"],
      w1f1, w1f2, w1e, b1_eff,
      params["mlp_w2"], params["mlp_b2"],
      params["mlp_w3"], params["mlp_b3"],
      params["mlp_w4"], params["mlp_b4"])


# ---------------------------------------------------------------------------
# Parameters (input-major weight layout: x @ W) + precomputed kernel constants
# ---------------------------------------------------------------------------
def make_params(key, C=4, H=16, W=16, econ_dim=11):
    ks = jax.random.split(key, 12)
    HW = H * W

    def lin(k, fan_in, shape):
        return jax.random.normal(k, shape, jnp.float32) * (1.0 / fan_in ** 0.5)

    lvl_w_img = lin(ks[0], C, (1, C))
    lvl_w_econ = lin(ks[1], econ_dim, (1, econ_dim))
    lvl_b = jax.random.normal(ks[2], (1, 1), jnp.float32) * 0.1
    mlp_w1 = lin(ks[3], 13, (13, 256))
    mlp_b1 = jax.random.normal(ks[4], (1, 256), jnp.float32) * 0.1

    params = {
        # surrogate pretrained level model: GAP(img) @ w_img.T + econ @ w_econ.T + b
        "lvl_w_img": lvl_w_img,
        "lvl_w_econ": lvl_w_econ,
        "lvl_b": lvl_b,
        # MLP: Linear(13,256) -> ReLU -> Dropout -> Linear(256,128) -> ReLU
        #      -> Linear(128,64) -> ReLU -> Linear(64,1)
        "mlp_w1": mlp_w1,
        "mlp_b1": mlp_b1,
        "mlp_w2": lin(ks[5], 256, (256, 128)),
        "mlp_b2": jax.random.normal(ks[6], (1, 128), jnp.float32) * 0.1,
        "mlp_w3": lin(ks[7], 128, (128, 64)),
        "mlp_b3": jax.random.normal(ks[8], (1, 64), jnp.float32) * 0.1,
        "mlp_w4": lin(ks[9], 64, (1, 64)),        # stored lane-major (1, 64)
        "mlp_b4": jax.random.normal(ks[10], (1, 1), jnp.float32) * 0.1,
    }
    # Kernel-layout constants, precomputed ONCE (not per forward call):
    #  * 1/HW-folded, HW-repeated image weight row: sum(img_flat * rep) == GAP(img) @ w.T
    #    (assumes NCHW -> (B, C*H*W) channel-major flattening).
    #  * Level-model bias folded into the first MLP bias: b_lvl*(W1[0]+W1[1]) + b1.
    params["lvl_w_img_rep"] = jnp.repeat(lvl_w_img / HW, HW, axis=1)          # (1, C*HW)
    params["mlp_w1_f1"] = mlp_w1[0:1, :]
    params["mlp_w1_f2"] = mlp_w1[1:2, :]
    params["mlp_w1_e"] = mlp_w1[2:13, :]
    params["mlp_b1_eff"] = mlp_b1 + lvl_b * (mlp_w1[0:1, :] + mlp_w1[1:2, :])
    return params


# ---------------------------------------------------------------------------
# Pure-JAX reference of the same forward (uses the raw, un-folded parameters)
# ---------------------------------------------------------------------------
def ref_forward(img1, img2, econ, params):
    B, C, H, W = img1.shape

    def level(img):
        pooled = img.reshape(B, C, H * W).mean(axis=2)                 # (B, C)
        return (pooled @ params["lvl_w_img"].T
                + econ @ params["lvl_w_econ"].T + params["lvl_b"])     # (B, 1)

    x = jnp.concatenate([level(img1), level(img2), econ], axis=1)      # (B, 13)
    h = jnp.maximum(x @ params["mlp_w1"] + params["mlp_b1"], 0.0)
    h = jnp.maximum(h @ params["mlp_w2"] + params["mlp_b2"], 0.0)
    h = jnp.maximum(h @ params["mlp_w3"] + params["mlp_b3"], 0.0)
    return h @ params["mlp_w4"].T + params["mlp_b4"]


if __name__ == "__main__":
    key = jax.random.PRNGKey(0)
    k1, k2, k3, kp = jax.random.split(key, 4)

    B, C, H, W = 2, 4, 16, 16
    ECON = 11

    img1 = jax.random.normal(k1, (B, C, H, W), jnp.float32)
    img2 = jax.random.normal(k2, (B, C, H, W), jnp.float32)
    econ_features = jax.random.normal(k3, (B, ECON), jnp.float32)
    params = make_params(kp, C=C, H=H, W=W, econ_dim=ECON)

    fwd = jax.jit(diff_from_level_model_forward)
    out = jax.block_until_ready(fwd(img1, img2, econ_features, params))

    assert out.shape == (B, 1), out.shape
    assert out.dtype == jnp.float32, out.dtype

    ref = ref_forward(img1, img2, econ_features, params)
    assert jnp.allclose(out, ref, atol=1e-3, rtol=1e-3), (out, ref)

    print("KERNEL_OK")
</pallas_src>

<mosaic_0001>
module attributes {stable_mosaic.version = 11 : i64} {
  func.func @diff_kernel(%arg0: i32, %arg1: memref<2x1024xf32, #tpu.memory_space<vmem>>, %arg2: memref<2x1024xf32, #tpu.memory_space<vmem>>, %arg3: memref<2x11xf32, #tpu.memory_space<vmem>>, %arg4: memref<1x1024xf32, #tpu.memory_space<vmem>>, %arg5: memref<1x11xf32, #tpu.memory_space<vmem>>, %arg6: memref<1x256xf32, #tpu.memory_space<vmem>>, %arg7: memref<1x256xf32, #tpu.memory_space<vmem>>, %arg8: memref<11x256xf32, #tpu.memory_space<vmem>>, %arg9: memref<1x256xf32, #tpu.memory_space<vmem>>, %arg10: memref<256x128xf32, #tpu.memory_space<vmem>>, %arg11: memref<1x128xf32, #tpu.memory_space<vmem>>, %arg12: memref<128x64xf32, #tpu.memory_space<vmem>>, %arg13: memref<1x64xf32, #tpu.memory_space<vmem>>, %arg14: memref<1x64xf32, #tpu.memory_space<vmem>>, %arg15: memref<1x1xf32, #tpu.memory_space<vmem>>, %arg16: memref<2x1xf32, #tpu.memory_space<vmem>>) attributes {dimension_semantics = [#tpu.dimension_semantics<parallel>], iteration_bounds = array<i64: 1>, scalar_prefetch = 0 : i64, scratch_operands = 0 : i64, tpu.core_type = #tpu.core_type<tc>, window_params = [{transform_indices = @transform_0, window_bounds = array<i64: 2, 1024>}, {transform_indices = @transform_1, window_bounds = array<i64: 2, 1024>}, {transform_indices = @transform_2, window_bounds = array<i64: 2, 11>}, {pipeline_mode = #tpu.pipeline_mode<synchronous>, transform_indices = @transform_3, window_bounds = array<i64: 1, 1024>}, {pipeline_mode = #tpu.pipeline_mode<synchronous>, transform_indices = @transform_4, window_bounds = array<i64: 1, 11>}, {pipeline_mode = #tpu.pipeline_mode<synchronous>, transform_indices = @transform_5, window_bounds = array<i64: 1, 256>}, {pipeline_mode = #tpu.pipeline_mode<synchronous>, transform_indices = @transform_6, window_bounds = array<i64: 1, 256>}, {pipeline_mode = #tpu.pipeline_mode<synchronous>, transform_indices = @transform_7, window_bounds = array<i64: 11, 256>}, {pipeline_mode = #tpu.pipeline_mode<synchronous>, transform_indices = @transform_8, window_bounds = array<i64: 1, 256>}, {pipeline_mode = #tpu.pipeline_mode<synchronous>, transform_indices = @transform_9, window_bounds = array<i64: 256, 128>}, {pipeline_mode = #tpu.pipeline_mode<synchronous>, transform_indices = @transform_10, window_bounds = array<i64: 1, 128>}, {pipeline_mode = #tpu.pipeline_mode<synchronous>, transform_indices = @transform_11, window_bounds = array<i64: 128, 64>}, {pipeline_mode = #tpu.pipeline_mode<synchronous>, transform_indices = @transform_12, window_bounds = array<i64: 1, 64>}, {pipeline_mode = #tpu.pipeline_mode<synchronous>, transform_indices = @transform_13, window_bounds = array<i64: 1, 64>}, {pipeline_mode = #tpu.pipeline_mode<synchronous>, transform_indices = @transform_14, window_bounds = array<i64: 1, 1>}, {transform_indices = @transform_15, window_bounds = array<i64: 2, 1>}]} {
    %c0 = arith.constant 0 : index
    %c0_0 = arith.constant 0 : index
    %0 = vector.load %arg3[%c0, %c0_0] : memref<2x11xf32, #tpu.memory_space<vmem>>, vector<2x11xf32>
    %c0_1 = arith.constant 0 : index
    %c0_2 = arith.constant 0 : index
    %1 = vector.load %arg4[%c0_1, %c0_2] : memref<1x1024xf32, #tpu.memory_space<vmem>>, vector<1x1024xf32>
    %c0_3 = arith.constant 0 : index
    %c0_4 = arith.constant 0 : index
    %2 = vector.load %arg5[%c0_3, %c0_4] : memref<1x11xf32, #tpu.memory_space<vmem>>, vector<1x11xf32>
    %3 = vector.broadcast %2 : vector<1x11xf32> to vector<2x11xf32>
    %4 = arith.mulf %0, %3 : vector<2x11xf32>
    %cst = arith.constant dense<0.000000e+00> : vector<2xf32>
    %5 = vector.multi_reduction <add>, %4, %cst [1] : vector<2x11xf32> to vector<2xf32>
    %6 = vector.shape_cast %5 : vector<2xf32> to vector<2x1xf32>
    %c0_5 = arith.constant 0 : index
    %c0_6 = arith.constant 0 : index
    %7 = vector.load %arg1[%c0_5, %c0_6] : memref<2x1024xf32, #tpu.memory_space<vmem>>, vector<2x1024xf32>
    %8 = vector.broadcast %1 : vector<1x1024xf32> to vector<2x1024xf32>
    %9 = arith.mulf %7, %8 : vector<2x1024xf32>
    %cst_7 = arith.constant dense<0.000000e+00> : vector<2xf32>
    %10 = vector.multi_reduction <add>, %9, %cst_7 [1] : vector<2x1024xf32> to vector<2xf32>
    %11 = vector.shape_cast %10 : vector<2xf32> to vector<2x1xf32>
    %12 = arith.addf %11, %6 : vector<2x1xf32>
    %c0_8 = arith.constant 0 : index
    %c0_9 = arith.constant 0 : index
    %13 = vector.load %arg2[%c0_8, %c0_9] : memref<2x1024xf32, #tpu.memory_space<vmem>>, vector<2x1024xf32>
    %14 = vector.broadcast %1 : vector<1x1024xf32> to vector<2x1024xf32>
    %15 = arith.mulf %13, %14 : vector<2x1024xf32>
    %cst_10 = arith.constant dense<0.000000e+00> : vector<2xf32>
    %16 = vector.multi_reduction <add>, %15, %cst_10 [1] : vector<2x1024xf32> to vector<2xf32>
    %17 = vector.shape_cast %16 : vector<2xf32> to vector<2x1xf32>
    %18 = arith.addf %17, %6 : vector<2x1xf32>
    %c0_11 = arith.constant 0 : index
    %c0_12 = arith.constant 0 : index
    %19 = vector.load %arg6[%c0_11, %c0_12] : memref<1x256xf32, #tpu.memory_space<vmem>>, vector<1x256xf32>
    %20 = vector.broadcast %12 : vector<2x1xf32> to vector<2x256xf32>
    %21 = vector.broadcast %19 : vector<1x256xf32> to vector<2x256xf32>
    %22 = arith.mulf %20, %21 : vector<2x256xf32>
    %c0_13 = arith.constant 0 : index
    %c0_14 = arith.constant 0 : index
    %23 = vector.load %arg7[%c0_13, %c0_14] : memref<1x256xf32, #tpu.memory_space<vmem>>, vector<1x256xf32>
    %24 = vector.broadcast %18 : vector<2x1xf32> to vector<2x256xf32>
    %25 = vector.broadcast %23 : vector<1x256xf32> to vector<2x256xf32>
    %26 = arith.mulf %24, %25 : vector<2x256xf32>
    %27 = arith.addf %22, %26 : vector<2x256xf32>
    %c0_15 = arith.constant 0 : index
    %c0_16 = arith.constant 0 : index
    %28 = vector.load %arg8[%c0_15, %c0_16] : memref<11x256xf32, #tpu.memory_space<vmem>>, vector<11x256xf32>
    %cst_17 = arith.constant dense<0.000000e+00> : vector<2x256xf32>
    %29 = tpu.matmul %0, %28, %cst_17 {dimension_numbers = #tpu.dot_dimension_numbers<[1], [0], [0], [1], [0, 0, 1, 1], [], []>} : vector<2x11xf32>, vector<11x256xf32>, vector<2x256xf32> -> vector<2x256xf32>
    %30 = arith.addf %27, %29 : vector<2x256xf32>
    %c0_18 = arith.constant 0 : index
    %c0_19 = arith.constant 0 : index
    %31 = vector.load %arg9[%c0_18, %c0_19] : memref<1x256xf32, #tpu.memory_space<vmem>>, vector<1x256xf32>
    %32 = vector.broadcast %31 : vector<1x256xf32> to vector<2x256xf32>
    %33 = arith.addf %30, %32 : vector<2x256xf32>
    %cst_20 = arith.constant 0.000000e+00 : f32
    %34 = vector.broadcast %cst_20 : f32 to vector<2x256xf32>
    %35 = arith.maximumf %33, %34 : vector<2x256xf32>
    %c0_21 = arith.constant 0 : index
    %c0_22 = arith.constant 0 : index
    %36 = vector.load %arg10[%c0_21, %c0_22] : memref<256x128xf32, #tpu.memory_space<vmem>>, vector<256x128xf32>
    %cst_23 = arith.constant dense<0.000000e+00> : vector<2x128xf32>
    %37 = tpu.matmul %35, %36, %cst_23 {dimension_numbers = #tpu.dot_dimension_numbers<[1], [0], [0], [1], [0, 0, 1, 1], [], []>} : vector<2x256xf32>, vector<256x128xf32>, vector<2x128xf32> -> vector<2x128xf32>
    %c0_24 = arith.constant 0 : index
    %c0_25 = arith.constant 0 : index
    %38 = vector.load %arg11[%c0_24, %c0_25] : memref<1x128xf32, #tpu.memory_space<vmem>>, vector<1x128xf32>
    %39 = vector.broadcast %38 : vector<1x128xf32> to vector<2x128xf32>
    %40 = arith.addf %37, %39 : vector<2x128xf32>
    %cst_26 = arith.constant 0.000000e+00 : f32
    %41 = vector.broadcast %cst_26 : f32 to vector<2x128xf32>
    %42 = arith.maximumf %40, %41 : vector<2x128xf32>
    %c0_27 = arith.constant 0 : index
    %c0_28 = arith.constant 0 : index
    %43 = vector.load %arg12[%c0_27, %c0_28] : memref<128x64xf32, #tpu.memory_space<vmem>>, vector<128x64xf32>
    %cst_29 = arith.constant dense<0.000000e+00> : vector<2x64xf32>
    %44 = tpu.matmul %42, %43, %cst_29 {dimension_numbers = #tpu.dot_dimension_numbers<[1], [0], [0], [1], [0, 0, 1, 1], [], []>} : vector<2x128xf32>, vector<128x64xf32>, vector<2x64xf32> -> vector<2x64xf32>
    %c0_30 = arith.constant 0 : index
    %c0_31 = arith.constant 0 : index
    %45 = vector.load %arg13[%c0_30, %c0_31] : memref<1x64xf32, #tpu.memory_space<vmem>>, vector<1x64xf32>
    %46 = vector.broadcast %45 : vector<1x64xf32> to vector<2x64xf32>
    %47 = arith.addf %44, %46 : vector<2x64xf32>
    %cst_32 = arith.constant 0.000000e+00 : f32
    %48 = vector.broadcast %cst_32 : f32 to vector<2x64xf32>
    %49 = arith.maximumf %47, %48 : vector<2x64xf32>
    %c0_33 = arith.constant 0 : index
    %c0_34 = arith.constant 0 : index
    %50 = vector.load %arg14[%c0_33, %c0_34] : memref<1x64xf32, #tpu.memory_space<vmem>>, vector<1x64xf32>
    %51 = vector.broadcast %50 : vector<1x64xf32> to vector<2x64xf32>
    %52 = arith.mulf %49, %51 : vector<2x64xf32>
    %cst_35 = arith.constant dense<0.000000e+00> : vector<2xf32>
    %53 = vector.multi_reduction <add>, %52, %cst_35 [1] : vector<2x64xf32> to vector<2xf32>
    %54 = vector.shape_cast %53 : vector<2xf32> to vector<2x1xf32>
    %c0_36 = arith.constant 0 : index
    %c0_37 = arith.constant 0 : index
    %55 = vector.load %arg15[%c0_36, %c0_37] : memref<1x1xf32, #tpu.memory_space<vmem>>, vector<1x1xf32>
    %56 = vector.broadcast %55 : vector<1x1xf32> to vector<2x1xf32>
    %57 = arith.addf %54, %56 : vector<2x1xf32>
    %c0_38 = arith.constant 0 : index
    %c0_39 = arith.constant 0 : index
    %58 = vector.load %arg16[%c0_38, %c0_39] : memref<2x1xf32, #tpu.memory_space<vmem>>, vector<2x1xf32>
    tpu.vector_store %arg16[%c0_38, %c0_39], %57 {strides = array<i32>} : memref<2x1xf32, #tpu.memory_space<vmem>>, vector<2x1xf32>,
    return
  }
  func.func @transform_0(%arg0: i32) -> (i32, i32) {
    %c0_i32 = arith.constant 0 : i32
    %c0_i32_0 = arith.constant 0 : i32
    return %arg0, %c0_i32 : i32, i32
  }
  func.func @transform_1(%arg0: i32) -> (i32, i32) {
    %c0_i32 = arith.constant 0 : i32
    %c0_i32_0 = arith.constant 0 : i32
    return %arg0, %c0_i32 : i32, i32
  }
  func.func @transform_2(%arg0: i32) -> (i32, i32) {
    %c0_i32 = arith.constant 0 : i32
    %c0_i32_0 = arith.constant 0 : i32
    return %arg0, %c0_i32 : i32, i32
  }
  func.func @transform_3(%arg0: i32) -> (i32, i32) {
    %c0_i32 = arith.constant 0 : i32
    %c0_i32_0 = arith.constant 0 : i32
    %c0_i32_1 = arith.constant 0 : i32
    return %c0_i32, %c0_i32_0 : i32, i32
  }
  func.func @transform_4(%arg0: i32) -> (i32, i32) {
    %c0_i32 = arith.constant 0 : i32
    %c0_i32_0 = arith.constant 0 : i32
    %c0_i32_1 = arith.constant 0 : i32
    return %c0_i32, %c0_i32_0 : i32, i32
  }
  func.func @transform_5(%arg0: i32) -> (i32, i32) {
    %c0_i32 = arith.constant 0 : i32
    %c0_i32_0 = arith.constant 0 : i32
    %c0_i32_1 = arith.constant 0 : i32
    return %c0_i32, %c0_i32_0 : i32, i32
  }
  func.func @transform_6(%arg0: i32) -> (i32, i32) {
    %c0_i32 = arith.constant 0 : i32
    %c0_i32_0 = arith.constant 0 : i32
    %c0_i32_1 = arith.constant 0 : i32
    return %c0_i32, %c0_i32_0 : i32, i32
  }
  func.func @transform_7(%arg0: i32) -> (i32, i32) {
    %c0_i32 = arith.constant 0 : i32
    %c0_i32_0 = arith.constant 0 : i32
    %c0_i32_1 = arith.constant 0 : i32
    return %c0_i32, %c0_i32_0 : i32, i32
  }
  func.func @transform_8(%arg0: i32) -> (i32, i32) {
    %c0_i32 = arith.constant 0 : i32
    %c0_i32_0 = arith.constant 0 : i32
    %c0_i32_1 = arith.constant 0 : i32
    return %c0_i32, %c0_i32_0 : i32, i32
  }
  func.func @transform_9(%arg0: i32) -> (i32, i32) {
    %c0_i32 = arith.constant 0 : i32
    %c0_i32_0 = arith.constant 0 : i32
    %c0_i32_1 = arith.constant 0 : i32
    return %c0_i32, %c0_i32_0 : i32, i32
  }
  func.func @transform_10(%arg0: i32) -> (i32, i32) {
    %c0_i32 = arith.constant 0 : i32
    %c0_i32_0 = arith.constant 0 : i32
    %c0_i32_1 = arith.constant 0 : i32
    return %c0_i32, %c0_i32_0 : i32, i32
  }
  func.func @transform_11(%arg0: i32) -> (i32, i32) {
    %c0_i32 = arith.constant 0 : i32
    %c0_i32_0 = arith.constant 0 : i32
    %c0_i32_1 = arith.constant 0 : i32
    return %c0_i32, %c0_i32_0 : i32, i32
  }
  func.func @transform_12(%arg0: i32) -> (i32, i32) {
    %c0_i32 = arith.constant 0 : i32
    %c0_i32_0 = arith.constant 0 : i32
    %c0_i32_1 = arith.constant 0 : i32
    return %c0_i32, %c0_i32_0 : i32, i32
  }
  func.func @transform_13(%arg0: i32) -> (i32, i32) {
    %c0_i32 = arith.constant 0 : i32
    %c0_i32_0 = arith.constant 0 : i32
    %c0_i32_1 = arith.constant 0 : i32
    return %c0_i32, %c0_i32_0 : i32, i32
  }
  func.func @transform_14(%arg0: i32) -> (i32, i32) {
    %c0_i32 = arith.constant 0 : i32
    %c0_i32_0 = arith.constant 0 : i32
    %c0_i32_1 = arith.constant 0 : i32
    return %c0_i32, %c0_i32_0 : i32, i32
  }
  func.func @transform_15(%arg0: i32) -> (i32, i32) {
    %c0_i32 = arith.constant 0 : i32
    %c0_i32_0 = arith.constant 0 : i32
    return %arg0, %c0_i32 : i32, i32
  }
}

</mosaic_0001>

<llo_original>
// kernel: diff_from_level_model_forward.1
$region0: #{diff_from_level_model_forward.1}
  #allocation0 [shape = 'u32[]', space=smem, size = 0x4, offset = 0x4, fixed_abs, tag = 'smem constant byte address 0x4 - core index']
  #allocation1 [shape = 'u32[144,128]{1,0:T(1,128)}', space=vmem, size = 0x12000, scoped, tag = 'internal scratch']
  #allocation2 [shape = 'f32[1,1]{1,0:T(1,128)S(1)}', space=vmem, size = 0x200, scoped, tag = 'scoped memory for diff_from_level_model_forward.1']
  %s0 = inlined_call_operand.vmem [shape: f32[2,1024], index: 0, kind: input, shape index: {}]
  %s1 = inlined_call_operand.vmem [shape: f32[2,1024], index: 1, kind: input, shape index: {}]
  %s2 = inlined_call_operand.vmem [shape: f32[2,11], index: 2, kind: input, shape index: {}]
  %s3 = inlined_call_operand.vmem [shape: f32[1,1024], index: 3, kind: input, shape index: {}]
  %s4 = inlined_call_operand.vmem [shape: f32[1,11], index: 4, kind: input, shape index: {}]
  %s5 = inlined_call_operand.vmem [shape: f32[1,256], index: 5, kind: input, shape index: {}]
  %s6 = inlined_call_operand.vmem [shape: f32[1,256], index: 6, kind: input, shape index: {}]
  %s7 = inlined_call_operand.vmem [shape: f32[11,256], index: 7, kind: input, shape index: {}]
  %s8 = inlined_call_operand.vmem [shape: f32[1,256], index: 8, kind: input, shape index: {}]
  %s9 = inlined_call_operand.vmem [shape: f32[256,128], index: 9, kind: input, shape index: {}]
  %s10 = inlined_call_operand.vmem [shape: f32[1,128], index: 10, kind: input, shape index: {}]
  %s11 = inlined_call_operand.vmem [shape: f32[128,64], index: 11, kind: input, shape index: {}]
  %s12 = inlined_call_operand.vmem [shape: f32[1,64], index: 12, kind: input, shape index: {}]
  %s13 = inlined_call_operand.vmem [shape: f32[1,64], index: 13, kind: input, shape index: {}]
  %s14 = inlined_call_operand.<no memory space> [shape: f32[1,1], index: 14, kind: input, shape index: {}]
  %s15 = inlined_call_operand.vmem [shape: f32[2,1], index: 15, kind: output, shape index: {}]
  %s16 = sld [smem:[#allocation0]]
  $region70: #{diff_from_level_model_forward.1} parent=0
    _
  %s18 = ssub.s32 1, %s16
  %s19 = scalar_select 0, %s18, %s16
  %v20 = vstv %s14
  %21 = vst [vmem:[#allocation2] sm:$0x1] %v20
  // Predicated region
  $region2: #{diff_from_level_model_forward.1} parent=0 // pred_check
    _
  $region3: #{diff_from_level_model_forward.1} parent=0 // pred_check_branch
    %23 = sbr.rel (0) target = $region5
  $region4: #{diff_from_level_model_forward.1} parent=0 // pred_region
    _
  $region5: #{diff_from_level_model_forward.1} parent=0 // pred_fallthru
    _
  // Predicated region
  $region6: #{diff_from_level_model_forward.1} parent=0 // pred_check
    _
  $region7: #{diff_from_level_model_forward.1} parent=0 // pred_check_branch
    %25 = sbr.rel (0) target = $region9
  $region8: #{diff_from_level_model_forward.1} parent=0 // pred_region
    _
  $region9: #{diff_from_level_model_forward.1} parent=0 // pred_fallthru
    _
  // Predicated region
  $region10: #{diff_from_level_model_forward.1} parent=0 // pred_check
    _
  $region11: #{diff_from_level_model_forward.1} parent=0 // pred_check_branch
    %27 = sbr.rel (0) target = $region13
  $region12: #{diff_from_level_model_forward.1} parent=0 // pred_region
    _
  $region13: #{diff_from_level_model_forward.1} parent=0 // pred_fallthru
    _
  // Predicated region
  $region14: #{diff_from_level_model_forward.1} parent=0 // pred_check
    _
  $region15: #{diff_from_level_model_forward.1} parent=0 // pred_check_branch
    %29 = sbr.rel (0) target = $region17
  $region16: #{diff_from_level_model_forward.1} parent=0 // pred_region
    _
  $region17: #{diff_from_level_model_forward.1} parent=0 // pred_fallthru
    _
  // Predicated region
  $region18: #{diff_from_level_model_forward.1} parent=0 // pred_check
    _
  $region19: #{diff_from_level_model_forward.1} parent=0 // pred_check_branch
    %31 = sbr.rel (0) target = $region21
  $region20: #{diff_from_level_model_forward.1} parent=0 // pred_region
    _
  $region21: #{diff_from_level_model_forward.1} parent=0 // pred_fallthru
    _
  // Predicated region
  $region22: #{diff_from_level_model_forward.1} parent=0 // pred_check
    _
  $region23: #{diff_from_level_model_forward.1} parent=0 // pred_check_branch
    %33 = sbr.rel (0) target = $region25
  $region24: #{diff_from_level_model_forward.1} parent=0 // pred_region
    _
  $region25: #{diff_from_level_model_forward.1} parent=0 // pred_fallthru
    _
  // Predicated region
  $region26: #{diff_from_level_model_forward.1} parent=0 // pred_check
    _
  $region27: #{diff_from_level_model_forward.1} parent=0 // pred_check_branch
    %35 = sbr.rel (0) target = $region29
  $region28: #{diff_from_level_model_forward.1} parent=0 // pred_region
    _
  $region29: #{diff_from_level_model_forward.1} parent=0 // pred_fallthru
    _
  // Predicated region
  $region30: #{diff_from_level_model_forward.1} parent=0 // pred_check
    _
  $region31: #{diff_from_level_model_forward.1} parent=0 // pred_check_branch
    %37 = sbr.rel (0) target = $region33
  $region32: #{diff_from_level_model_forward.1} parent=0 // pred_region
    _
  $region33: #{diff_from_level_model_forward.1} parent=0 // pred_fallthru
    _
  // Predicated region
  $region34: #{diff_from_level_model_forward.1} parent=0 // pred_check
    _
  $region35: #{diff_from_level_model_forward.1} parent=0 // pred_check_branch
    %39 = sbr.rel (0) target = $region37
  $region36: #{diff_from_level_model_forward.1} parent=0 // pred_region
    _
  $region37: #{diff_from_level_model_forward.1} parent=0 // pred_fallthru
    _
  // Predicated region
  $region38: #{diff_from_level_model_forward.1} parent=0 // pred_check
    _
  $region39: #{diff_from_level_model_forward.1} parent=0 // pred_check_branch
    %41 = sbr.rel (0) target = $region41
  $region40: #{diff_from_level_model_forward.1} parent=0 // pred_region
    _
  $region41: #{diff_from_level_model_forward.1} parent=0 // pred_fallthru
    _
  // Predicated region
  $region42: #{diff_from_level_model_forward.1} parent=0 // pred_check
    _
  $region43: #{diff_from_level_model_forward.1} parent=0 // pred_check_branch
    %43 = sbr.rel (0) target = $region45
  $region44: #{diff_from_level_model_forward.1} parent=0 // pred_region
    _
  $region45: #{diff_from_level_model_forward.1} parent=0 // pred_fallthru
    _
  // Predicated region
  $region46: #{diff_from_level_model_forward.1} parent=0 // pred_check
    _
  $region47: #{diff_from_level_model_forward.1} parent=0 // pred_check_branch
    %45 = sbr.rel (0) target = $region49
  $region48: #{diff_from_level_model_forward.1} parent=0 // pred_region
    _
  $region49: #{diff_from_level_model_forward.1} parent=0 // pred_fallthru
    _
  // Predicated region
  $region50: #{diff_from_level_model_forward.1} parent=0 // pred_check
    _
  $region51: #{diff_from_level_model_forward.1} parent=0 // pred_check_branch
    %47 = sbr.rel (0) target = $region53
  $region52: #{diff_from_level_model_forward.1} parent=0 // pred_region
    _
  $region53: #{diff_from_level_model_forward.1} parent=0 // pred_fallthru
    _
  // Predicated region
  $region54: #{diff_from_level_model_forward.1} parent=0 // pred_check
    _
  $region55: #{diff_from_level_model_forward.1} parent=0 // pred_check_branch
    %49 = sbr.rel (0) target = $region57
  $region56: #{diff_from_level_model_forward.1} parent=0 // pred_region
    _
  $region57: #{diff_from_level_model_forward.1} parent=0 // pred_fallthru
    _
  // Predicated region
  $region58: #{diff_from_level_model_forward.1} parent=0 // pred_check
    _
  $region59: #{diff_from_level_model_forward.1} parent=0 // pred_check_branch
    %51 = sbr.rel (0) target = $region61
  $region60: #{diff_from_level_model_forward.1} parent=0 // pred_region
    _
  $region61: #{diff_from_level_model_forward.1} parent=0 // pred_fallthru
    _
  %v52 = vld [vmem:[%s2] sm:$0x3]
  %v53 = vld [vmem:[%s3] sm:$0xff]
  %v54 = vld [vmem:[%s4] sm:$0x1]
  %v56 = vlaneseq
  %v57 = vshrl.u32 %v56, 7
  %v58 = vsub.s32 0, %v57
  %v59 = vrot.slane %v54, %v58
  %v61 = vmul.f32 %v52, %v59
  %vm62 = vcmask 82944
  %v63 = vsel %vm62, %v61, 0.0
  %64 = vadd.xlane.f32.xlu0 %v63
  %v65 = vpop.xlane.xlu0 %64
  %v66 = vld [vmem:[%s0] sm:$0xff]
  %v67 = vld [vmem:[%s0 + $0x8] sm:$0xff]
  %v69 = vlaneseq
  %v70 = vshrl.u32 %v69, 7
  %v71 = vsub.s32 0, %v70
  %v72 = vrot.slane %v53, %v71
  %v73 = vlaneseq
  %v74 = vshrl.u32 %v73, 7
  %v75 = vsub.s32 1, %v74
  %v76 = vrot.slane %v53, %v75
  %v77 = vlaneseq
  %v78 = vshrl.u32 %v77, 7
  %v79 = vsub.s32 2, %v78
  %v80 = vrot.slane %v53, %v79
  %v81 = vlaneseq
  %v82 = vshrl.u32 %v81, 7
  %v83 = vsub.s32 3, %v82
  %v84 = vrot.slane %v53, %v83
  %v85 = vlaneseq
  %v86 = vshrl.u32 %v85, 7
  %v87 = vsub.s32 4, %v86
  %v88 = vrot.slane %v53, %v87
  %v89 = vlaneseq
  %v90 = vshrl.u32 %v89, 7
  %v91 = vsub.s32 5, %v90
  %v92 = vrot.slane %v53, %v91
  %v93 = vlaneseq
  %v94 = vshrl.u32 %v93, 7
  %v95 = vsub.s32 6, %v94
  %v96 = vrot.slane %v53, %v95
  %v97 = vlaneseq
  %v98 = vshrl.u32 %v97, 7
  %v99 = vsub.s32 7, %v98
  %v100 = vrot.slane %v53, %v99
  %v101 = vcombine.low %v72, %v76
  %v102 = vcombine.low %v80, %v84
  %v104 = vunpack.c.l.s4 1983009808
  %v105 = vunpack.c.0.s8 %v104
  %v106 = vlaneseq
  %v107 = vshrl.u32 %v106, 7
  %v108 = vsub.s32 %v105, %v107
  %v109 = vrot.slane %v101, %v108
  %v111 = vunpack.c.l.s4 1983009808
  %v112 = vunpack.c.0.s8 %v111
  %v113 = vlaneseq
  %v114 = vshrl.u32 %v113, 7
  %v115 = vsub.s32 %v112, %v114
  %v116 = vrot.slane %v102, %v115
  %v117 = vcombine.low %v109, %v116
  %v118 = vcombine.low %v88, %v92
  %v119 = vcombine.low %v96, %v100
  %v121 = vunpack.c.l.s4 1983009808
  %v122 = vunpack.c.0.s8 %v121
  %v123 = vlaneseq
  %v124 = vshrl.u32 %v123, 7
  %v125 = vsub.s32 %v122, %v124
  %v126 = vrot.slane %v118, %v125
  %v128 = vunpack.c.l.s4 1983009808
  %v129 = vunpack.c.0.s8 %v128
  %v130 = vlaneseq
  %v131 = vshrl.u32 %v130, 7
  %v132 = vsub.s32 %v129, %v131
  %v133 = vrot.slane %v119, %v132
  %v134 = vcombine.low %v126, %v133
  %v137 = vmul.f32 %v66, %v117
  %v138 = vmul.f32 %v67, %v134
  %v141 = vcombine.high %v137, %v137
  %v143 = vunpack.c.l.s4 1983009808
  %v144 = vunpack.c.0.s8 %v143
  %v145 = vlaneseq
  %v146 = vshrl.u32 %v145, 7
  %v147 = vsub.s32 %v144, %v146
  %v148 = vrot.slane %v137, %v147
  %v150 = vunpack.c.l.s4 1983009808
  %v151 = vunpack.c.0.s8 %v150
  %v152 = vlaneseq
  %v153 = vshrl.u32 %v152, 7
  %v154 = vsub.s32 %v151, %v153
  %v155 = vrot.slane %v141, %v154
  %v156 = vcombine.high %v148, %v148
  %v157 = vcombine.high %v155, %v155
  %v158 = vcombine.high %v138, %v138
  %v160 = vunpack.c.l.s4 1983009808
  %v161 = vunpack.c.0.s8 %v160
  %v162 = vlaneseq
  %v163 = vshrl.u32 %v162, 7
  %v164 = vsub.s32 %v161, %v163
  %v165 = vrot.slane %v138, %v164
  %v167 = vunpack.c.l.s4 1983009808
  %v168 = vunpack.c.0.s8 %v167
  %v169 = vlaneseq
  %v170 = vshrl.u32 %v169, 7
  %v171 = vsub.s32 %v168, %v170
  %v172 = vrot.slane %v158, %v171
  %v173 = vcombine.high %v165, %v165
  %v174 = vcombine.high %v172, %v172
  %vm183 = vcmask 1041408
  %v184 = vsel %vm183, %v148, 0.0
  %v185 = vsel %vm183, %v156, 0.0
  %v186 = vadd.f32 %v184, %v185
  %v187 = vsel %vm183, %v155, 0.0
  %v188 = vadd.f32 %v186, %v187
  %v189 = vsel %vm183, %v157, 0.0
  %v190 = vadd.f32 %v188, %v189
  %v191 = vsel %vm183, %v165, 0.0
  %v192 = vadd.f32 %v190, %v191
  %v193 = vsel %vm183, %v173, 0.0
  %v194 = vadd.f32 %v192, %v193
  %v195 = vsel %vm183, %v172, 0.0
  %v196 = vadd.f32 %v194, %v195
  %v197 = vsel %vm183, %v174, 0.0
  %v198 = vadd.f32 %v196, %v197
  %199 = vadd.xlane.f32.xlu0 %v198
  %v200 = vpop.xlane.xlu0 %199
  %v201 = vadd.f32 %v200, %v65
  %v202 = vld [vmem:[%s1] sm:$0xff]
  %v203 = vld [vmem:[%s1 + $0x8] sm:$0xff]
  %v204 = vmul.f32 %v202, %v117
  %v205 = vmul.f32 %v203, %v134
  %v208 = vcombine.high %v204, %v204
  %v210 = vunpack.c.l.s4 1983009808
  %v211 = vunpack.c.0.s8 %v210
  %v212 = vlaneseq
  %v213 = vshrl.u32 %v212, 7
  %v214 = vsub.s32 %v211, %v213
  %v215 = vrot.slane %v204, %v214
  %v217 = vunpack.c.l.s4 1983009808
  %v218 = vunpack.c.0.s8 %v217
  %v219 = vlaneseq
  %v220 = vshrl.u32 %v219, 7
  %v221 = vsub.s32 %v218, %v220
  %v222 = vrot.slane %v208, %v221
  %v223 = vcombine.high %v215, %v215
  %v224 = vcombine.high %v222, %v222
  %v225 = vcombine.high %v205, %v205
  %v227 = vunpack.c.l.s4 1983009808
  %v228 = vunpack.c.0.s8 %v227
  %v229 = vlaneseq
  %v230 = vshrl.u32 %v229, 7
  %v231 = vsub.s32 %v228, %v230
  %v232 = vrot.slane %v205, %v231
  %v234 = vunpack.c.l.s4 1983009808
  %v235 = vunpack.c.0.s8 %v234
  %v236 = vlaneseq
  %v237 = vshrl.u32 %v236, 7
  %v238 = vsub.s32 %v235, %v237
  %v239 = vrot.slane %v225, %v238
  %v240 = vcombine.high %v232, %v232
  %v241 = vcombine.high %v239, %v239
  %v250 = vsel %vm183, %v215, 0.0
  %v251 = vsel %vm183, %v223, 0.0
  %v252 = vadd.f32 %v250, %v251
  %v253 = vsel %vm183, %v222, 0.0
  %v254 = vadd.f32 %v252, %v253
  %v255 = vsel %vm183, %v224, 0.0
  %v256 = vadd.f32 %v254, %v255
  %v257 = vsel %vm183, %v232, 0.0
  %v258 = vadd.f32 %v256, %v257
  %v259 = vsel %vm183, %v240, 0.0
  %v260 = vadd.f32 %v258, %v259
  %v261 = vsel %vm183, %v239, 0.0
  %v262 = vadd.f32 %v260, %v261
  %v263 = vsel %vm183, %v241, 0.0
  %v264 = vadd.f32 %v262, %v263
  %265 = vadd.xlane.f32.xlu0 %v264
  %v266 = vpop.xlane.xlu0 %265
  %v267 = vadd.f32 %v266, %v65
  %v268 = vld [vmem:[%s5] sm:$0x3]
  %v270 = vlaneseq
  %v271 = vshrl.u32 %v270, 7
  %v272 = vsub.s32 0, %v271
  %v273 = vrot.slane %v268, %v272
  %v274 = vlaneseq
  %v275 = vshrl.u32 %v274, 7
  %v276 = vsub.s32 1, %v275
  %v277 = vrot.slane %v268, %v276
  %v280 = vmul.f32 %v201, %v273
  %v281 = vmul.f32 %v201, %v277
  %v282 = vld [vmem:[%s6] sm:$0x3]
  %v284 = vlaneseq
  %v285 = vshrl.u32 %v284, 7
  %v286 = vsub.s32 0, %v285
  %v287 = vrot.slane %v282, %v286
  %v288 = vlaneseq
  %v289 = vshrl.u32 %v288, 7
  %v290 = vsub.s32 1, %v289
  %v291 = vrot.slane %v282, %v290
  %v294 = vmul.f32 %v267, %v287
  %v295 = vmul.f32 %v267, %v291
  %v296 = vadd.f32 %v280, %v294
  %v297 = vadd.f32 %v281, %v295
  %v298 = vld [vmem:[%s7] sm:$0xff]
  %v299 = vld [vmem:[%s7 + $0x8] sm:$0xff]
  %v300 = vld [vmem:[%s7 + $0x10] sm:$0x7]
  %v301 = vld [vmem:[%s7 + $0x18] sm:$0x7]
  %vm302 = vcmask 89088
  %v304 = vsel %vm302, %v52, 0
  %vm306 = vcmask 1042432
  %v308 = vsel %vm306, %v300, 0
  %v311 = vsel %vm306, %v301, 0
  %313 = vmatprep.subr.mxu0 0.0
  %314 = vmatpush1.msra.mxu0 0.0
  %315 = vmatprep.subr.mxu0 0.0
  %316 = vmatpush1.msra.mxu0 0.0
  %317 = vmatprep.subr.mxu0 0.0
  %318 = vmatpush1.msra.mxu0 0.0
  %319 = vmatprep.subr.mxu0 0.0
  %320 = vmatpush1.msra.mxu0 0.0
  %321 = vmatprep.subr.mxu0 0.0
  %322 = vmatpush1.msra.mxu0 0.0
  %323 = vmatprep.subr.mxu0 0.0
  %324 = vmatpush1.msra.mxu0 0.0
  %325 = vmatprep.subr.mxu0 0.0
  %326 = vmatpush1.msra.mxu0 0.0
  %327 = vmatprep.subr.mxu0 0.0
  %328 = vmatpush1.msra.mxu0 0.0
  %329 = vmatprep.subr.mxu0 0.0
  %330 = vmatpush1.msra.mxu0 0.0
  %331 = vmatprep.subr.mxu0 0.0
  %332 = vmatpush1.msra.mxu0 0.0
  %333 = vmatprep.subr.mxu0 0.0
  %334 = vmatpush1.msra.mxu0 0.0
  %335 = vmatprep.subr.mxu0 0.0
  %336 = vmatpush1.msra.mxu0 0.0
  %337 = vmatprep.subr.mxu0 0.0
  %338 = vmatpush1.msra.mxu0 0.0
  %339 = vmatprep.subr.mxu0 0.0
  %340 = vmatpush1.msra.mxu0 0.0
  %341 = vmatprep.subr.mxu0 %v311
  %342 = vmatpush1.msra.mxu0 %v308
  %343 = vmatprep.subr.mxu0 %v299
  %344 = vmatpush1.msra.mxu0 %v298
  %345 = vmatprep.subr.mxu0 0.0
  %346 = vmatpush2.msra.mxu0 0.0
  %347 = vmatprep.subr.mxu0 0.0
  %348 = vmatpush2.msra.mxu0 0.0
  %349 = vmatprep.subr.mxu0 0.0
  %350 = vmatpush2.msra.mxu0 0.0
  %351 = vmatprep.subr.mxu0 0.0
  %352 = vmatpush2.msra.mxu0 0.0
  %353 = vmatprep.subr.mxu0 0.0
  %354 = vmatpush2.msra.mxu0 0.0
  %355 = vmatprep.subr.mxu0 0.0
  %356 = vmatpush2.msra.mxu0 0.0
  %357 = vmatprep.subr.mxu0 0.0
  %358 = vmatpush2.msra.mxu0 0.0
  %359 = vmatprep.subr.mxu0 0.0
  %360 = vmatpush2.msra.mxu0 0.0
  %361 = vmatprep.subr.mxu0 0.0
  %362 = vmatpush2.msra.mxu0 0.0
  %363 = vmatprep.subr.mxu0 0.0
  %364 = vmatpush2.msra.mxu0 0.0
  %365 = vmatprep.subr.mxu0 0.0
  %366 = vmatpush2.msra.mxu0 0.0
  %367 = vmatprep.subr.mxu0 0.0
  %368 = vmatpush2.msra.mxu0 0.0
  %369 = vmatprep.subr.mxu0 0.0
  %370 = vmatpush2.msra.mxu0 0.0
  %371 = vmatprep.subr.mxu0 0.0
  %372 = vmatpush2.msra.mxu0 0.0
  %373 = vmatprep.subr.mxu0 0.0
  %374 = vmatpush2.msra.mxu0 0.0
  %375 = vmatprep.subr.mxu0 0.0
  %376 = vmatpush2.msra.mxu0 0.0
  %377 = vmatprep.mubr.f32.mxu0 0.0
  %378 = vmatmul.mubr.f32.gmra.mxu0 %v304
  %v379 = vpop.f32.mrf.mxu0
  %v380 = vadd.f32 0.0, %v379
  %v381 = vpop.f32.mrf.mxu0
  %v382 = vadd.f32 0.0, %v381
  %383 = vdwg.mxu0
  %v384 = vadd.f32 %v296, %v380
  %v385 = vadd.f32 %v297, %v382
  %v386 = vld [vmem:[%s8] sm:$0x3]
  %v388 = vlaneseq
  %v389 = vshrl.u32 %v388, 7
  %v390 = vsub.s32 0, %v389
  %v391 = vrot.slane %v386, %v390
  %v392 = vlaneseq
  %v393 = vshrl.u32 %v392, 7
  %v394 = vsub.s32 1, %v393
  %v395 = vrot.slane %v386, %v394
  %v398 = vadd.f32 %v384, %v391
  %v399 = vadd.f32 %v385, %v395
  %v400 = vmax.f32 %v398, 0.0
  %v401 = vmax.f32 %v399, 0.0
  %v402 = vld [vmem:[%s9] sm:$0xff]
  %v403 = vld [vmem:[%s9 + $0x8] sm:$0xff]
  %v404 = vld [vmem:[%s9 + $0x10] sm:$0xff]
  %v405 = vld [vmem:[%s9 + $0x18] sm:$0xff]
  %v406 = vld [vmem:[%s9 + $0x20] sm:$0xff]
  %v407 = vld [vmem:[%s9 + $0x28] sm:$0xff]
  %v408 = vld [vmem:[%s9 + $0x30] sm:$0xff]
  %v409 = vld [vmem:[%s9 + $0x38] sm:$0xff]
  %v410 = vld [vmem:[%s9 + $0x40] sm:$0xff]
  %v411 = vld [vmem:[%s9 + $0x48] sm:$0xff]
  %v412 = vld [vmem:[%s9 + $0x50] sm:$0xff]
  %v413 = vld [vmem:[%s9 + $0x58] sm:$0xff]
  %v414 = vld [vmem:[%s9 + $0x60] sm:$0xff]
  %v415 = vld [vmem:[%s9 + $0x68] sm:$0xff]
  %v416 = vld [vmem:[%s9 + $0x70] sm:$0xff]
  %v417 = vld [vmem:[%s9 + $0x78] sm:$0xff]
  %v418 = vld [vmem:[%s9 + $0x80] sm:$0xff]
  %v419 = vld [vmem:[%s9 + $0x88] sm:$0xff]
  %v420 = vld [vmem:[%s9 + $0x90] sm:$0xff]
  %v421 = vld [vmem:[%s9 + $0x98] sm:$0xff]
  %v422 = vld [vmem:[%s9 + $0xa0] sm:$0xff]
  %v423 = vld [vmem:[%s9 + $0xa8] sm:$0xff]
  %v424 = vld [vmem:[%s9 + $0xb0] sm:$0xff]
  %v425 = vld [vmem:[%s9 + $0xb8] sm:$0xff]
  %v426 = vld [vmem:[%s9 + $0xc0] sm:$0xff]
  %v427 = vld [vmem:[%s9 + $0xc8] sm:$0xff]
  %v428 = vld [vmem:[%s9 + $0xd0] sm:$0xff]
  %v429 = vld [vmem:[%s9 + $0xd8] sm:$0xff]
  %v430 = vld [vmem:[%s9 + $0xe0] sm:$0xff]
  %v431 = vld [vmem:[%s9 + $0xe8] sm:$0xff]
  %v432 = vld [vmem:[%s9 + $0xf0] sm:$0xff]
  %v433 = vld [vmem:[%s9 + $0xf8] sm:$0xff]
  %v434 = vld [vmem:[%s10] sm:$0x1]
  %v436 = vlaneseq
  %v437 = vshrl.u32 %v436, 7
  %v438 = vsub.s32 0, %v437
  %v439 = vrot.slane %v434, %v438
  %441 = vmatprep.subr.mxu0 0.0
  %442 = vmatpush1.msra.mxu0 %v417
  %443 = vmatprep.subr.mxu0 0.0
  %444 = vmatpush1.msra.mxu0 %v416
  %445 = vmatprep.subr.mxu0 0.0
  %446 = vmatpush1.msra.mxu0 %v415
  %447 = vmatprep.subr.mxu0 0.0
  %448 = vmatpush1.msra.mxu0 %v414
  %449 = vmatprep.subr.mxu0 0.0
  %450 = vmatpush1.msra.mxu0 %v413
  %451 = vmatprep.subr.mxu0 0.0
  %452 = vmatpush1.msra.mxu0 %v412
  %453 = vmatprep.subr.mxu0 0.0
  %454 = vmatpush1.msra.mxu0 %v411
  %455 = vmatprep.subr.mxu0 0.0
  %456 = vmatpush1.msra.mxu0 %v410
  %457 = vmatprep.subr.mxu0 0.0
  %458 = vmatpush1.msra.mxu0 %v409
  %459 = vmatprep.subr.mxu0 0.0
  %460 = vmatpush1.msra.mxu0 %v408
  %461 = vmatprep.subr.mxu0 0.0
  %462 = vmatpush1.msra.mxu0 %v407
  %463 = vmatprep.subr.mxu0 0.0
  %464 = vmatpush1.msra.mxu0 %v406
  %465 = vmatprep.subr.mxu0 0.0
  %466 = vmatpush1.msra.mxu0 %v405
  %467 = vmatprep.subr.mxu0 0.0
  %468 = vmatpush1.msra.mxu0 %v404
  %469 = vmatprep.subr.mxu0 0.0
  %470 = vmatpush1.msra.mxu0 %v403
  %471 = vmatprep.subr.mxu0 0.0
  %472 = vmatpush1.msra.mxu0 %v402
  %473 = vmatprep.subr.mxu0 0.0
  %474 = vmatpush2.msra.mxu0 %v433
  %475 = vmatprep.subr.mxu0 0.0
  %476 = vmatpush2.msra.mxu0 %v432
  %477 = vmatprep.subr.mxu0 0.0
  %478 = vmatpush2.msra.mxu0 %v431
  %479 = vmatprep.subr.mxu0 0.0
  %480 = vmatpush2.msra.mxu0 %v430
  %481 = vmatprep.subr.mxu0 0.0
  %482 = vmatpush2.msra.mxu0 %v429
  %483 = vmatprep.subr.mxu0 0.0
  %484 = vmatpush2.msra.mxu0 %v428
  %485 = vmatprep.subr.mxu0 0.0
  %486 = vmatpush2.msra.mxu0 %v427
  %487 = vmatprep.subr.mxu0 0.0
  %488 = vmatpush2.msra.mxu0 %v426
  %489 = vmatprep.subr.mxu0 0.0
  %490 = vmatpush2.msra.mxu0 %v425
  %491 = vmatprep.subr.mxu0 0.0
  %492 = vmatpush2.msra.mxu0 %v424
  %493 = vmatprep.subr.mxu0 0.0
  %494 = vmatpush2.msra.mxu0 %v423
  %495 = vmatprep.subr.mxu0 0.0
  %496 = vmatpush2.msra.mxu0 %v422
  %497 = vmatprep.subr.mxu0 0.0
  %498 = vmatpush2.msra.mxu0 %v421
  %499 = vmatprep.subr.mxu0 0.0
  %500 = vmatpush2.msra.mxu0 %v420
  %501 = vmatprep.subr.mxu0 0.0
  %502 = vmatpush2.msra.mxu0 %v419
  %503 = vmatprep.subr.mxu0 0.0
  %504 = vmatpush2.msra.mxu0 %v418
  %505 = vmatprep.mubr.f32.mxu0 %v401
  %506 = vmatmul.mubr.f32.gmra.mxu0 %v400
  %v507 = vpop.f32.mrf.mxu0
  %v508 = vadd.f32 %v439, %v507
  %v509 = vpop.f32.mrf.mxu0
  %510 = vdwg.mxu0
  %v511 = vmax.f32 %v508, 0.0
  %v512 = vld [vmem:[%s11] sm:$0xff]
  %v513 = vld [vmem:[%s11 + $0x8] sm:$0xff]
  %v514 = vld [vmem:[%s11 + $0x10] sm:$0xff]
  %v515 = vld [vmem:[%s11 + $0x18] sm:$0xff]
  %v516 = vld [vmem:[%s11 + $0x20] sm:$0xff]
  %v517 = vld [vmem:[%s11 + $0x28] sm:$0xff]
  %v518 = vld [vmem:[%s11 + $0x30] sm:$0xff]
  %v519 = vld [vmem:[%s11 + $0x38] sm:$0xff]
  %v520 = vld [vmem:[%s11 + $0x40] sm:$0xff]
  %v521 = vld [vmem:[%s11 + $0x48] sm:$0xff]
  %v522 = vld [vmem:[%s11 + $0x50] sm:$0xff]
  %v523 = vld [vmem:[%s11 + $0x58] sm:$0xff]
  %v524 = vld [vmem:[%s11 + $0x60] sm:$0xff]
  %v525 = vld [vmem:[%s11 + $0x68] sm:$0xff]
  %v526 = vld [vmem:[%s11 + $0x70] sm:$0xff]
  %v527 = vld [vmem:[%s11 + $0x78] sm:$0xff]
  %v528 = vld [vmem:[%s12] sm:$0x1]
  %v530 = vlaneseq
  %v531 = vshrl.u32 %v530, 7
  %v532 = vsub.s32 0, %v531
  %v533 = vrot.slane %v528, %v532
  %535 = vmatprep.subr.mxu0 0.0
  %536 = vmatpush1.msra.mxu0 %v527
  %537 = vmatprep.subr.mxu0 0.0
  %538 = vmatpush1.msra.mxu0 %v526
  %539 = vmatprep.subr.mxu0 0.0
  %540 = vmatpush1.msra.mxu0 %v525
  %541 = vmatprep.subr.mxu0 0.0
  %542 = vmatpush1.msra.mxu0 %v524
  %543 = vmatprep.subr.mxu0 0.0
  %544 = vmatpush1.msra.mxu0 %v523
  %545 = vmatprep.subr.mxu0 0.0
  %546 = vmatpush1.msra.mxu0 %v522
  %547 = vmatprep.subr.mxu0 0.0
  %548 = vmatpush1.msra.mxu0 %v521
  %549 = vmatprep.subr.mxu0 0.0
  %550 = vmatpush1.msra.mxu0 %v520
  %551 = vmatprep.subr.mxu0 0.0
  %552 = vmatpush1.msra.mxu0 %v519
  %553 = vmatprep.subr.mxu0 0.0
  %554 = vmatpush1.msra.mxu0 %v518
  %555 = vmatprep.subr.mxu0 0.0
  %556 = vmatpush1.msra.mxu0 %v517
  %557 = vmatprep.subr.mxu0 0.0
  %558 = vmatpush1.msra.mxu0 %v516
  %559 = vmatprep.subr.mxu0 0.0
  %560 = vmatpush1.msra.mxu0 %v515
  %561 = vmatprep.subr.mxu0 0.0
  %562 = vmatpush1.msra.mxu0 %v514
  %563 = vmatprep.subr.mxu0 0.0
  %564 = vmatpush1.msra.mxu0 %v513
  %565 = vmatprep.subr.mxu0 0.0
  %566 = vmatpush1.msra.mxu0 %v512
  %567 = vmatprep.subr.mxu0 0.0
  %568 = vmatpush2.msra.mxu0 0.0
  %569 = vmatprep.subr.mxu0 0.0
  %570 = vmatpush2.msra.mxu0 0.0
  %571 = vmatprep.subr.mxu0 0.0
  %572 = vmatpush2.msra.mxu0 0.0
  %573 = vmatprep.subr.mxu0 0.0
  %574 = vmatpush2.msra.mxu0 0.0
  %575 = vmatprep.subr.mxu0 0.0
  %576 = vmatpush2.msra.mxu0 0.0
  %577 = vmatprep.subr.mxu0 0.0
  %578 = vmatpush2.msra.mxu0 0.0
  %579 = vmatprep.subr.mxu0 0.0
  %580 = vmatpush2.msra.mxu0 0.0
  %581 = vmatprep.subr.mxu0 0.0
  %582 = vmatpush2.msra.mxu0 0.0
  %583 = vmatprep.subr.mxu0 0.0
  %584 = vmatpush2.msra.mxu0 0.0
  %585 = vmatprep.subr.mxu0 0.0
  %586 = vmatpush2.msra.mxu0 0.0
  %587 = vmatprep.subr.mxu0 0.0
  %588 = vmatpush2.msra.mxu0 0.0
  %589 = vmatprep.subr.mxu0 0.0
  %590 = vmatpush2.msra.mxu0 0.0
  %591 = vmatprep.subr.mxu0 0.0
  %592 = vmatpush2.msra.mxu0 0.0
  %593 = vmatprep.subr.mxu0 0.0
  %594 = vmatpush2.msra.mxu0 0.0
  %595 = vmatprep.subr.mxu0 0.0
  %596 = vmatpush2.msra.mxu0 0.0
  %597 = vmatprep.subr.mxu0 0.0
  %598 = vmatpush2.msra.mxu0 0.0
  %599 = vmatprep.mubr.f32.mxu0 0.0
  %600 = vmatmul.mubr.f32.gmra.mxu0 %v511
  %v601 = vpop.f32.mrf.mxu0
  %v602 = vadd.f32 %v533, %v601
  %v603 = vpop.f32.mrf.mxu0
  %604 = vdwg.mxu0
  %v605 = vmax.f32 %v602, 0.0
  %v606 = vld [vmem:[%s13] sm:$0x1]
  %v608 = vlaneseq
  %v609 = vshrl.u32 %v608, 7
  %v610 = vsub.s32 0, %v609
  %v611 = vrot.slane %v606, %v610
  %v613 = vmul.f32 %v605, %v611
  %vm614 = vcmask 517120
  %v615 = vsel %vm614, %v613, 0.0
  %616 = vadd.xlane.f32.xlu0 %v615
  %v617 = vpop.xlane.xlu0 %616
  %v618 = vld [vmem:[#allocation2] sm:$0x1]
  %v620 = vlaneseq
  %v621 = vshrl.u32 %v620, 7
  %v622 = vsub.s32 0, %v621
  %v623 = vrot.slane %v618, %v622
  %v625 = vadd.f32 %v617, %v623
  %vm626 = vcmask 1024
  %627 = vst.msk [vmem:[%s15] sm:$0x3] %vm626, %v625
  // Predicated region
  $region62: #{diff_from_level_model_forward.1} parent=0 // pred_check
    _
  $region63: #{diff_from_level_model_forward.1} parent=0 // pred_check_branch
    %629 = sbr.rel (0) target = $region65
  $region64: #{diff_from_level_model_forward.1} parent=0 // pred_region
    _
  $region65: #{diff_from_level_model_forward.1} parent=0 // pred_fallthru
    _
  // Predicated region
  $region66: #{diff_from_level_model_forward.1} parent=0 // pred_check
    _
  $region67: #{diff_from_level_model_forward.1} parent=0 // pred_check_branch
    %631 = sbr.rel (0) target = $region69
  $region68: #{diff_from_level_model_forward.1} parent=0 // pred_region
    _
  $region69: #{diff_from_level_model_forward.1} parent=0 // pred_fallthru
    _

</llo_original>
